<compile_context>
chip_gen: v6e
topology: v6e:2x2x1
jax: 0.10.0
libtpu: 0.0.40
codegen_flags: <defaults>
</compile_context>

<pallas_src>
import jax
import jax.numpy as jnp
from jax.experimental import pallas as pl
from jax.experimental.pallas import tpu as pltpu


def _round_up(x, m):
    return ((x + m - 1) // m) * m


def _tpu_vmem_bytes():
    """Physical VMEM capacity for generation-aware tiling; safe fallback = 128 MiB."""
    default = 128 * 1024 * 1024
    try:
        info = pltpu.get_tpu_info()
        return int(getattr(info, "vmem_capacity_bytes", default))
    except Exception:
        return default


def _row_diff_loss(e, m2, n_cols):
    """Closed-form DifferenceLoss rows, numerically centered.

    diff[i] = (1/N) * sum_j ((e_i - e_j) * m_i * m_j)^2
            = m2_i/N * (ec_i^2*S0 - 2*ec_i*S1c + S2c),   ec = e - row_mean(e)
    with S0 = sum_j m2_j, S1c = sum_j ec_j*m2_j, S2c = sum_j ec_j^2*m2_j.
    `m2` is the squared mask, or None for the fully-unmasked fast path
    (then S0 is the compile-time constant n_cols and no mask math is emitted).
    Rows whose e (and m2) were pre-zeroed contribute exactly 0.
    """
    inv_n = jnp.float32(1.0 / n_cols)
    if m2 is None:
        s0 = jnp.float32(n_cols)
        s1 = jnp.sum(e, axis=-1, keepdims=True)
    else:
        s0 = jnp.sum(m2, axis=-1, keepdims=True)
        s1 = jnp.sum(e * m2, axis=-1, keepdims=True)
    # Per-row centering: (e_i - e_j) is shift-invariant, so any per-row offset is
    # mathematically exact; centering kills cancellation when errors share a large
    # common offset with small spread.
    mu = s1 / jnp.maximum(s0, jnp.float32(1.0))
    ec = e - mu
    ecm = ec if m2 is None else ec * m2
    s1c = jnp.sum(ecm, axis=-1, keepdims=True)
    s2c = jnp.sum(ec * ecm, axis=-1, keepdims=True)
    core = (ec * ec) * s0 - 2.0 * ec * s1c + s2c
    if m2 is not None:
        core = core * m2
    return core * inv_n


def _make_fused_kernel(n_rows, n_cols, has_mask):
    """Single-block fused kernel: diff-loss + global normalization + weighted MSE."""
    num_elements = float(n_rows * n_cols)

    def kernel(*refs):
        if has_mask:
            p_ref, t_ref, m_ref, out_ref = refs
        else:
            p_ref, t_ref, out_ref = refs
        p = p_ref[...].astype(jnp.float32)
        t = t_ref[...].astype(jnp.float32)
        e = p - t
        if has_mask:
            m = m_ref[...].astype(jnp.float32)
            m2 = m * m
        else:
            m2 = None
        diff = _row_diff_loss(e, m2, n_cols)
        # as_weight_matrix: one reciprocal + per-element multiply (no divides).
        total = jnp.sum(diff, keepdims=True)                      # (1, 1)
        # TODO(synk): total == 0 (fully-masked / pred==true) yields NaN/Inf, matching
        # the PyTorch reference.
        scale = jnp.float32(num_elements) * pl.reciprocal(total, approx=False)
        out_ref[...] = (e * e * diff * scale).astype(out_ref.dtype)

    return kernel


def _make_pass1_kernel(n_rows, n_cols, block_b, has_mask, needs_row_mask):
    """Pass-1 (batch-gridded): w_unnorm = e^2 * diff  +  per-block partial sum of diff."""

    def kernel(*refs):
        if has_mask:
            p_ref, t_ref, m_ref, w_ref, psum_ref = refs
        else:
            p_ref, t_ref, w_ref, psum_ref = refs
        p = p_ref[...].astype(jnp.float32)
        t = t_ref[...].astype(jnp.float32)
        e = p - t
        if has_mask:
            m = m_ref[...].astype(jnp.float32)
            m2 = m * m
        else:
            m2 = None
        if needs_row_mask:
            # Last batch block overhangs the array: OOB-read rows hold unspecified
            # values, so scrub them (jnp.where also removes NaN/Inf) *before* any
            # row reduction or the global partial sum.
            row = (pl.program_id(0) * block_b
                   + jax.lax.broadcasted_iota(jnp.int32, e.shape, 0))
            valid = row < n_rows
            e = jnp.where(valid, e, jnp.float32(0.0))
            if has_mask:
                m2 = jnp.where(valid, m2, jnp.float32(0.0))
        diff = _row_diff_loss(e, m2, n_cols)
        w_ref[...] = (e * e * diff).astype(w_ref.dtype)           # unnormalized product
        psum_ref[...] = jnp.broadcast_to(jnp.sum(diff), psum_ref.shape).astype(jnp.float32)

    return kernel


def _pass2_kernel(scale_ref, w_ref, out_ref):
    """Pass-2: out = w_unnorm * scale, scale is a (1,1) f32 SMEM scalar."""
    out_ref[...] = (w_ref[...].astype(jnp.float32) * scale_ref[0, 0]).astype(out_ref.dtype)


def weighted_loss(y_pred, y_true, mask=None, *, two_pass=None, block_b=None):
    """Pallas TPU implementation of WeightedLoss.forward
    (weight_by=DifferenceLoss(MSE 'none'), loss_fn=MSE(reduction='none'))."""
    assert y_pred.shape == y_true.shape, "Shapes of input and target must match"
    if mask is not None:
        assert mask.shape == y_pred.shape
    B, N = y_pred.shape
    has_mask = mask is not None

    vmem_cap = _tpu_vmem_bytes()
    vmem_limit = int(min(vmem_cap // 2, 48 * 1024 * 1024))        # 48 MiB v5e/v6e, 32 MiB v7x

    if two_pass is None:
        # Grid-less fused path holds ~10 full-size f32 temporaries: keep it well below
        # physical VMEM (1<<20 elems on 128 MiB parts, 512K on v7x's 64 MiB).
        fused_max_elems = min(1 << 20, vmem_cap // 128)
        two_pass = (B * N) > fused_max_elems

    operands = [y_pred, y_true] + ([mask] if has_mask else [])

    if not two_pass:
        # Whole array as a single block (block_shape == array dims), no padding, no grid.
        full_blk = pl.BlockSpec((B, N), lambda: (0, 0))
        return pl.pallas_call(
            _make_fused_kernel(B, N, has_mask),
            out_shape=jax.ShapeDtypeStruct((B, N), y_pred.dtype),
            in_specs=[full_blk] * len(operands),
            out_specs=full_blk,
            compiler_params=pltpu.CompilerParams(vmem_limit_bytes=vmem_limit),
        )(*operands)

    # ---------------- two-pass path: gridded over the batch axis ----------------
    if block_b is None:
        # ~3 MiB blocks on 128 MiB parts, ~2 MiB on v7x: big enough to amortize the
        # ~0.35us/step overhead, small enough for double-buffering under vmem_limit.
        target_bytes = max(512 * 1024, vmem_limit // 16)
        block_b = (target_bytes // (N * 4)) & ~7
        block_b = max(8, min(block_b, _round_up(B, 8)))
    else:
        block_b = max(8, _round_up(block_b, 8))
    n_blocks = pl.cdiv(B, block_b)
    needs_row_mask = (B % block_b) != 0

    row_blk = pl.BlockSpec((block_b, N), lambda i: (i, 0))
    psum_blk = pl.BlockSpec((1, 8, 128), lambda i: (i, 0, 0))
    grid_params = pltpu.CompilerParams(
        dimension_semantics=("parallel",),    # shardable across v7x's two TensorCores
        vmem_limit_bytes=vmem_limit)

    w_unnorm, psums = pl.pallas_call(
        _make_pass1_kernel(B, N, block_b, has_mask, needs_row_mask),
        out_shape=(jax.ShapeDtypeStruct((B, N), y_pred.dtype),           # input dtype
                   jax.ShapeDtypeStruct((n_blocks, 8, 128), jnp.float32)),
        grid=(n_blocks,),
        in_specs=[row_blk] * len(operands),
        out_specs=(row_blk, psum_blk),
        compiler_params=grid_params,
    )(*operands)

    # Global normalization: reduce n_blocks partial sums (not the full (B,N) array).
    total = jnp.sum(psums[:, 0, 0])
    # TODO(synk): total == 0 (fully-masked input) yields NaN/Inf, matching the reference.
    scale = (jnp.float32(B * N) / total).reshape(1, 1).astype(jnp.float32)

    out = pl.pallas_call(
        _pass2_kernel,
        out_shape=jax.ShapeDtypeStruct((B, N), y_pred.dtype),
        grid=(n_blocks,),
        in_specs=[pl.BlockSpec(memory_space=pltpu.MemorySpace.SMEM), row_blk],
        out_specs=row_blk,
        compiler_params=grid_params,
    )(scale, w_unnorm)
    return out


def _reference(y_pred, y_true, mask):
    """Pure-JAX reference mirroring the PyTorch module exactly (pairwise form)."""
    mm = mask[:, :, None] * mask[:, None, :]
    pd = (y_pred[:, :, None] - y_pred[:, None, :]) * mm
    td = (y_true[:, :, None] - y_true[:, None, :]) * mm
    w = jnp.mean((pd - td) ** 2, axis=2)
    w = y_pred.size * w / jnp.sum(w)
    return (y_pred - y_true) ** 2 * w


if __name__ == "__main__":
    key = jax.random.PRNGKey(0)
    k1, k2, k3, k4, k5, k6 = jax.random.split(key, 6)

    # --- test 1: toy shape, user-provided mask, fused single-block path ---
    B, N = 4, 16
    y_pred = jax.random.normal(k1, (B, N), dtype=jnp.float32)
    y_true = jax.random.normal(k2, (B, N), dtype=jnp.float32)
    mask = (jax.random.uniform(k3, (B, N)) > 0.2).astype(jnp.float32)

    out = jax.block_until_ready(weighted_loss(y_pred, y_true, mask))
    ref = _reference(y_pred, y_true, mask)
    assert out.shape == (B, N) and out.dtype == jnp.float32
    assert jnp.allclose(out, ref, rtol=1e-4, atol=1e-5), "fused masked mismatch"

    # --- test 2: mask=None fast path (no mask DMA, no mask math) ---
    out2 = jax.block_until_ready(weighted_loss(y_pred, y_true))
    ref2 = _reference(y_pred, y_true, jnp.ones_like(y_pred))
    assert jnp.allclose(out2, ref2, rtol=1e-4, atol=1e-5), "fused unmasked mismatch"

    # --- test 3: forced two-pass, masked, overhanging last batch block (12 % 8 != 0) ---
    B2, N2 = 12, 200
    yp2 = jax.random.normal(k4, (B2, N2), dtype=jnp.float32)
    yt2 = jax.random.normal(k5, (B2, N2), dtype=jnp.float32)
    mk2 = (jax.random.uniform(k6, (B2, N2)) > 0.3).astype(jnp.float32)
    out3 = jax.block_until_ready(weighted_loss(yp2, yt2, mk2, two_pass=True, block_b=8))
    ref3 = _reference(yp2, yt2, mk2)
    assert out3.shape == (B2, N2)
    assert jnp.allclose(out3, ref3, rtol=1e-4, atol=1e-5), "gridded masked mismatch"

    # --- test 4: two-pass path, mask=None (row-validity mask only on the last block) ---
    out4 = jax.block_until_ready(weighted_loss(yp2, yt2, two_pass=True, block_b=8))
    ref4 = _reference(yp2, yt2, jnp.ones_like(yp2))
    assert jnp.allclose(out4, ref4, rtol=1e-4, atol=1e-5), "gridded unmasked mismatch"

    # --- test 5: two-pass auto block sizing (covers generation-aware block_b path) ---
    out5 = jax.block_until_ready(weighted_loss(yp2, yt2, mk2, two_pass=True))
    assert jnp.allclose(out5, ref3, rtol=1e-4, atol=1e-5), "auto-block masked mismatch"

    # --- test 6: bf16 inputs -> bf16 intermediate (input-dtype w_unnorm) ---
    yp_b = yp2.astype(jnp.bfloat16)
    yt_b = yt2.astype(jnp.bfloat16)
    out6 = jax.block_until_ready(
        weighted_loss(yp_b, yt_b, mk2.astype(jnp.bfloat16), two_pass=True, block_b=8))
    ref6 = _reference(yp_b.astype(jnp.float32), yt_b.astype(jnp.float32), mk2)
    assert out6.dtype == jnp.bfloat16
    assert jnp.allclose(out6.astype(jnp.float32), ref6, rtol=5e-2, atol=5e-2), "bf16 mismatch"

    print("KERNEL_OK")
</pallas_src>

<mosaic_0001>
module attributes {stable_mosaic.version = 11 : i64} {
  func.func @kernel(%arg0: memref<4x16xf32, #tpu.memory_space<vmem>>, %arg1: memref<4x16xf32, #tpu.memory_space<vmem>>, %arg2: memref<4x16xf32, #tpu.memory_space<vmem>>, %arg3: memref<4x16xf32, #tpu.memory_space<vmem>>) attributes {dimension_semantics = [], scalar_prefetch = 0 : i64, scratch_operands = 0 : i64, tpu.core_type = #tpu.core_type<tc>} {
    %c0 = arith.constant 0 : index
    %c0_0 = arith.constant 0 : index
    %0 = vector.load %arg0[%c0, %c0_0] : memref<4x16xf32, #tpu.memory_space<vmem>>, vector<4x16xf32>
    %c0_1 = arith.constant 0 : index
    %c0_2 = arith.constant 0 : index
    %1 = vector.load %arg1[%c0_1, %c0_2] : memref<4x16xf32, #tpu.memory_space<vmem>>, vector<4x16xf32>
    %2 = arith.subf %0, %1 : vector<4x16xf32>
    %c0_3 = arith.constant 0 : index
    %c0_4 = arith.constant 0 : index
    %3 = vector.load %arg2[%c0_3, %c0_4] : memref<4x16xf32, #tpu.memory_space<vmem>>, vector<4x16xf32>
    %4 = arith.mulf %3, %3 : vector<4x16xf32>
    %cst = arith.constant dense<0.000000e+00> : vector<4xf32>
    %5 = vector.multi_reduction <add>, %4, %cst [1] : vector<4x16xf32> to vector<4xf32>
    %6 = vector.shape_cast %5 : vector<4xf32> to vector<4x1xf32>
    %7 = arith.mulf %2, %4 : vector<4x16xf32>
    %cst_5 = arith.constant dense<0.000000e+00> : vector<4xf32>
    %8 = vector.multi_reduction <add>, %7, %cst_5 [1] : vector<4x16xf32> to vector<4xf32>
    %9 = vector.shape_cast %8 : vector<4xf32> to vector<4x1xf32>
    %cst_6 = arith.constant 1.000000e+00 : f32
    %10 = vector.broadcast %cst_6 : f32 to vector<4x1xf32>
    %11 = arith.maximumf %6, %10 : vector<4x1xf32>
    %12 = arith.divf %9, %11 : vector<4x1xf32>
    %13 = vector.broadcast %12 : vector<4x1xf32> to vector<4x16xf32>
    %14 = arith.subf %2, %13 : vector<4x16xf32>
    %15 = arith.mulf %14, %4 : vector<4x16xf32>
    %cst_7 = arith.constant dense<0.000000e+00> : vector<4xf32>
    %16 = vector.multi_reduction <add>, %15, %cst_7 [1] : vector<4x16xf32> to vector<4xf32>
    %17 = vector.shape_cast %16 : vector<4xf32> to vector<4x1xf32>
    %18 = arith.mulf %14, %15 : vector<4x16xf32>
    %cst_8 = arith.constant dense<0.000000e+00> : vector<4xf32>
    %19 = vector.multi_reduction <add>, %18, %cst_8 [1] : vector<4x16xf32> to vector<4xf32>
    %20 = vector.shape_cast %19 : vector<4xf32> to vector<4x1xf32>
    %21 = arith.mulf %14, %14 : vector<4x16xf32>
    %22 = vector.broadcast %6 : vector<4x1xf32> to vector<4x16xf32>
    %23 = arith.mulf %21, %22 : vector<4x16xf32>
    %cst_9 = arith.constant 2.000000e+00 : f32
    %24 = vector.broadcast %cst_9 : f32 to vector<4x16xf32>
    %25 = arith.mulf %24, %14 : vector<4x16xf32>
    %26 = vector.broadcast %17 : vector<4x1xf32> to vector<4x16xf32>
    %27 = arith.mulf %25, %26 : vector<4x16xf32>
    %28 = arith.subf %23, %27 : vector<4x16xf32>
    %29 = vector.broadcast %20 : vector<4x1xf32> to vector<4x16xf32>
    %30 = arith.addf %28, %29 : vector<4x16xf32>
    %31 = arith.mulf %30, %4 : vector<4x16xf32>
    %cst_10 = arith.constant 6.250000e-02 : f32
    %32 = vector.broadcast %cst_10 : f32 to vector<4x16xf32>
    %33 = arith.mulf %31, %32 : vector<4x16xf32>
    %34 = vector.shape_cast %33 : vector<4x16xf32> to vector<1x4x16xf32>
    %cst_11 = arith.constant dense<0.000000e+00> : vector<1xf32>
    %35 = vector.multi_reduction <add>, %34, %cst_11 [1, 2] : vector<1x4x16xf32> to vector<1xf32>
    %36 = vector.shape_cast %35 : vector<1xf32> to vector<1x1x1xf32>
    %37 = vector.extract %36[0, 0, 0] : f32 from vector<1x1x1xf32>
    %38 = vector.broadcast %37 : f32 to vector<1x1xf32>
    %39 = tpu.reciprocal %38 : vector<1x1xf32> -> vector<1x1xf32>
    %cst_12 = arith.constant 6.400000e+01 : f32
    %40 = vector.broadcast %cst_12 : f32 to vector<1x1xf32>
    %41 = arith.mulf %40, %39 : vector<1x1xf32>
    %42 = arith.mulf %2, %2 : vector<4x16xf32>
    %43 = arith.mulf %42, %33 : vector<4x16xf32>
    %44 = vector.broadcast %41 : vector<1x1xf32> to vector<4x16xf32>
    %45 = arith.mulf %43, %44 : vector<4x16xf32>
    %c0_13 = arith.constant 0 : index
    %c0_14 = arith.constant 0 : index
    %46 = vector.load %arg3[%c0_13, %c0_14] : memref<4x16xf32, #tpu.memory_space<vmem>>, vector<4x16xf32>
    tpu.vector_store %arg3[%c0_13, %c0_14], %45 {strides = array<i32>} : memref<4x16xf32, #tpu.memory_space<vmem>>, vector<4x16xf32>,
    return
  }
}

</mosaic_0001>

<llo_original>
// kernel: tpu_custom_call.1
$region0: #{tpu_custom_call.1}
  #allocation0 [shape = 'u32[]', space=smem, size = 0x4, offset = 0x4, fixed_abs, tag = 'smem constant byte address 0x4 - core index']
  #allocation1 [shape = 'u32[144,128]{1,0:T(1,128)}', space=vmem, size = 0x12000, scoped, tag = 'internal scratch']
  %s0 = inlined_call_operand.hbm [shape: f32[4,16], index: 0, kind: input, shape index: {}]
  %s1 = inlined_call_operand.hbm [shape: f32[4,16], index: 1, kind: input, shape index: {}]
  %s2 = inlined_call_operand.hbm [shape: f32[4,16], index: 2, kind: input, shape index: {}]
  %s3 = inlined_call_operand.hbm [shape: f32[4,16], index: 3, kind: output, shape index: {}]
  %s4 = sld [smem:[#allocation0]]
  $region34: #{tpu_custom_call.1} parent=0
    _
  %s6 = ssub.s32 1, %s4
  %s7 = scalar_select 0, %s6, %s4
  $region1: #{tpu_custom_call.1} parent=0
    #allocation2 [shape = 'u8[2048]{0}', space=vmem, size = 0x800, scoped, tag = 'input window, operand 0, single buffered']
    #allocation3 [shape = 's32[1]{0}', space=sflag, size = 0x4, scoped, tag = 'scoped memory for tpu_custom_call.1']
    #allocation4 [shape = 's32[1]{0}', space=sflag, size = 0x4, scoped, tag = 'scoped memory for tpu_custom_call.1']
    #allocation5 [shape = 'u8[2048]{0}', space=vmem, size = 0x800, scoped, tag = 'input window, operand 1, single buffered']
    #allocation6 [shape = 's32[1]{0}', space=sflag, size = 0x4, scoped, tag = 'scoped memory for tpu_custom_call.1']
    #allocation7 [shape = 'u8[2048]{0}', space=vmem, size = 0x800, scoped, tag = 'input window, operand 2, single buffered']
    #allocation8 [shape = 'u8[2048]{0}', space=vmem, size = 0x800, scoped, tag = 'output window, operand 0, single buffered']
    %8 = vsyncpa [#allocation3], 0
    %9 = vsyncpa [#allocation6], 0
    %10 = vsyncpa [#allocation4], 0
    // Predicated region
    $region2: #{tpu_custom_call.1} parent=1 // pred_check
      _
    $region3: #{tpu_custom_call.1} parent=1 // pred_check_branch
      %12 = sbr.rel (0) target = $region5
    $region4: #{tpu_custom_call.1} parent=1 // pred_region
      %s14 = ssub.s32 64, 64
      %15 = vsyncadd [#allocation3], %s14
      %s17 = sshll.u32 [#allocation2], 4
      %s18 = int_to_ptr.vmem [resolvable:$true] %s17
      %20 = dma.hbm_to_vmem [thread:$0]  %s0, 64, %s18, [#allocation3]
    $region5: #{tpu_custom_call.1} parent=1 // pred_fallthru
      _
    // Predicated region
    $region6: #{tpu_custom_call.1} parent=1 // pred_check
      _
    $region7: #{tpu_custom_call.1} parent=1 // pred_check_branch
      %22 = sbr.rel (0) target = $region9
    $region8: #{tpu_custom_call.1} parent=1 // pred_region
      %s24 = ssub.s32 64, 64
      %25 = vsyncadd [#allocation6], %s24
      %s27 = sshll.u32 [#allocation5], 4
      %s28 = int_to_ptr.vmem [resolvable:$true] %s27
      %30 = dma.hbm_to_vmem [thread:$0]  %s1, 64, %s28, [#allocation6]
    $region9: #{tpu_custom_call.1} parent=1 // pred_fallthru
      _
    // Predicated region
    $region10: #{tpu_custom_call.1} parent=1 // pred_check
      _
    $region11: #{tpu_custom_call.1} parent=1 // pred_check_branch
      %32 = sbr.rel (0) target = $region13
    $region12: #{tpu_custom_call.1} parent=1 // pred_region
      %s34 = ssub.s32 64, 64
      %35 = vsyncadd [#allocation6], %s34
      %s37 = sshll.u32 [#allocation7], 4
      %s38 = int_to_ptr.vmem [resolvable:$true] %s37
      %40 = dma.hbm_to_vmem [thread:$0]  %s2, 64, %s38, [#allocation6]
    $region13: #{tpu_custom_call.1} parent=1 // pred_fallthru
      _
    // Predicated region
    $region14: #{tpu_custom_call.1} parent=1 // pred_check
      _
    $region15: #{tpu_custom_call.1} parent=1 // pred_check_branch
      %42 = sbr.rel (0) target = $region17
    $region16: #{tpu_custom_call.1} parent=1 // pred_region
      %43 = dma.done [#allocation3], 64
    $region17: #{tpu_custom_call.1} parent=1 // pred_fallthru
      _
    // Predicated region
    $region18: #{tpu_custom_call.1} parent=1 // pred_check
      _
    $region19: #{tpu_custom_call.1} parent=1 // pred_check_branch
      %45 = sbr.rel (0) target = $region21
    $region20: #{tpu_custom_call.1} parent=1 // pred_region
      %46 = dma.done [#allocation6], 64
    $region21: #{tpu_custom_call.1} parent=1 // pred_fallthru
      _
    // Predicated region
    $region22: #{tpu_custom_call.1} parent=1 // pred_check
      _
    $region23: #{tpu_custom_call.1} parent=1 // pred_check_branch
      %48 = sbr.rel (0) target = $region25
    $region24: #{tpu_custom_call.1} parent=1 // pred_region
      %49 = dma.done [#allocation6], 64
    $region25: #{tpu_custom_call.1} parent=1 // pred_fallthru
      _
    %v50 = vld [vmem:[#allocation2] sm:$0xf]
    %v51 = vld [vmem:[#allocation5] sm:$0xf]
    %v52 = vsub.f32 %v50, %v51
    %v53 = vld [vmem:[#allocation7] sm:$0xf]
    %v54 = vmul.f32 %v53, %v53
    %vm55 = vcmask 125952
    %v56 = vsel %vm55, %v54, 0.0
    %57 = vadd.xlane.f32.xlu0 %v56
    %v58 = vpop.xlane.xlu0 %57
    %v59 = vmul.f32 %v52, %v54
    %v60 = vsel %vm55, %v59, 0.0
    %61 = vadd.xlane.f32.xlu0 %v60
    %v62 = vpop.xlane.xlu0 %61
    %v63 = vmax.f32 %v58, 1.0
    %v64 = vrcp.pop %v63
    %v65 = vmul.f32 %v62, %v64
    %v66 = vsub.f32 %v52, %v65
    %v67 = vmul.f32 %v66, %v54
    %v68 = vsel %vm55, %v67, 0.0
    %69 = vadd.xlane.f32.xlu0 %v68
    %v70 = vpop.xlane.xlu0 %69
    %v71 = vmul.f32 %v66, %v67
    %v72 = vsel %vm55, %v71, 0.0
    %73 = vadd.xlane.f32.xlu0 %v72
    %v74 = vpop.xlane.xlu0 %73
    %v75 = vmul.f32 %v66, %v66
    %v76 = vmul.f32 %v75, %v58
    %v77 = vmul.f32 %v66, 2.0
    %v78 = vmul.f32 %v77, %v70
    %v79 = vsub.f32 %v76, %v78
    %v80 = vadd.f32 %v79, %v74
    %v81 = vmul.f32 %v80, %v54
    %v82 = vmul.f32 %v81, 0.0625
    %v83 = vsel %vm55, %v82, 0.0
    %84 = vadd.xlane.f32.xlu0 %v83
    %v85 = vpop.xlane.xlu0 %84
    %v86 = vrot.slane %v85, 4
    %v87 = vadd.f32 %v85, %v86
    %v88 = vrot.slane %v87, 2
    %v89 = vadd.f32 %v87, %v88
    %v90 = vrot.slane %v89, 1
    %v91 = vadd.f32 %v89, %v90
    %s92 = vtos %v91
    %v93 = vstv %s92
    %v94 = vrcp.pop %v93
    %v95 = vmul.f32 %v94, 64.0
    %v96 = vmul.f32 %v52, %v52
    %v97 = vmul.f32 %v96, %v82
    %v98 = vmul.f32 %v97, %v95
    %99 = vst.msk [vmem:[#allocation8] sm:$0xf] %vm55, %v98
    // Predicated region
    $region26: #{tpu_custom_call.1} parent=1 // pred_check
      _
    $region27: #{tpu_custom_call.1} parent=1 // pred_check_branch
      %101 = sbr.rel (0) target = $region29
    $region28: #{tpu_custom_call.1} parent=1 // pred_region
      %s103 = ssub.s32 64, 64
      %104 = vsyncadd [#allocation4], %s103
      %s106 = sshll.u32 [#allocation8], 4
      %s107 = int_to_ptr.vmem [resolvable:$true] %s106
      %109 = dma.vmem_to_hbm [thread:$0]  %s107, 64, %s3, [#allocation4]
    $region29: #{tpu_custom_call.1} parent=1 // pred_fallthru
      _
    // Predicated region
    $region30: #{tpu_custom_call.1} parent=1 // pred_check
      _
    $region31: #{tpu_custom_call.1} parent=1 // pred_check_branch
      %111 = sbr.rel (0) target = $region33
    $region32: #{tpu_custom_call.1} parent=1 // pred_region
      %112 = dma.done [#allocation4], 64
    $region33: #{tpu_custom_call.1} parent=1 // pred_fallthru
      _
    %113 = vsyncpa [#allocation3], 1
    %114 = vsyncpa [#allocation6], 1
    %115 = vsyncpa [#allocation4], 1

</llo_original>
